<compile_context>
chip_gen: v7x
topology: tpu7x:2x2x1
jax: 0.10.0
libtpu: 0.0.40
codegen_flags: <defaults>
</compile_context>

<pallas_src>
import re

import jax
import jax.numpy as jnp
from jax.experimental import pallas as pl
from jax.experimental.pallas import tpu as pltpu


def _tpu_generation():
    """Best-effort TPU generation (5, 6, 7, ...) from device_kind; None if unknown."""
    try:
        kind = jax.devices()[0].device_kind  # e.g. "TPU v5 lite", "TPU v6e"
        m = re.search(r"(\d+)", kind)
        return int(m.group(1)) if m else None
    except Exception:
        return None


def _mlp_kernel(x_ref, w0_ref, b0_ref, wh_ref, bh_ref, we_ref, be_ref, o_ref):
    """One batch tile: x_ref (n_in, TB) -> o_ref (n_out, TB), feature-major."""
    n_in = x_ref.shape[0]
    n_hidden_layers = wh_ref.shape[0]
    act_dtype = wh_ref.dtype  # compute dtype for MXU operands / activations

    x = x_ref[...]        # (n_in, TB)  f32
    w0 = w0_ref[...]      # (H, n_in)   f32

    # --- First layer: Linear(n_in -> H) + tanh ------------------------------
    if n_in <= 4:
        # Tiny contraction depth (e.g. (x, t) -> 2): a depth-2 MXU matmul pays
        # full push/pop latency for almost no work.  Do it as VPU broadcast
        # FMAs (different VLIW slot than the MXU).
        acc = b0_ref[...] + w0[:, 0:1] * x[0:1, :]          # (H, TB)
        for k in range(1, n_in):
            acc = acc + w0[:, k:k + 1] * x[k:k + 1, :]
    else:
        acc = jnp.dot(w0, x, preferred_element_type=jnp.float32) + b0_ref[...]
    h = jnp.tanh(acc.astype(act_dtype))                     # (H, TB)

    # --- Hidden layers: (N_Layers - 1) x [Linear(H -> H) + tanh] ------------
    # Static unroll; each layer uses distinct wh[l]/bh[l].
    for l in range(n_hidden_layers):
        z = (jnp.dot(wh_ref[l], h, preferred_element_type=jnp.float32)
             + bh_ref[l])                                    # (H, TB) f32
        h = jnp.tanh(z.astype(act_dtype))

    # --- Final layer: Linear(H -> n_out), no activation ----------------------
    out = (jnp.dot(we_ref[...], h, preferred_element_type=jnp.float32)
           + be_ref[...])                                    # (n_out, TB)
    o_ref[...] = out.astype(o_ref.dtype)                     # lane-dense store


def fcn_forward(x, params, *, tile_b=4096, compute_dtype=None,
                x_feature_major=False):
    """Fused MLP forward.

    x: (batch, n_input) row-major (as in the PyTorch module), or
       (n_input, batch) if x_feature_major=True (skips the wrapper transpose).
    params = (w0, b0, wh, bh, we, be), PyTorch-Linear style:
      w0: (H, n_in)       b0: (H, 1)
      wh: (L-1, H, H)     bh: (L-1, H, 1)
      we: (n_out, H)      be: (n_out, 1)
    compute_dtype: None -> auto (bf16 on v6e/v7x, f32 on v5e/older/unknown);
      or pass jnp.float32 / jnp.bfloat16 explicitly.
    """
    w0, b0, wh, bh, we, be = params
    if x_feature_major:
        n_in, batch = x.shape
        x_t = x.astype(jnp.float32)                          # (n_in, batch)
    else:
        batch, n_in = x.shape
        # Small, unavoidable layout pass (n_in columns only).  Produce x
        # feature-major upstream and pass x_feature_major=True to avoid it.
        x_t = x.astype(jnp.float32).T                        # (n_in, batch)

    n_hidden = w0.shape[0]
    n_out = we.shape[0]
    n_hidden_layers = wh.shape[0]

    gen = _tpu_generation()
    if compute_dtype is None:
        compute_dtype = jnp.bfloat16 if (gen is not None and gen >= 6) else jnp.float32

    # ---- Batch tiling -------------------------------------------------------
    batch_pad128 = 128 * pl.cdiv(batch, 128)
    tile = max(128, 128 * pl.cdiv(int(tile_b), 128))         # 128-lane aligned
    tile = min(tile, batch_pad128)                           # don't over-tile
    if gen is not None and gen >= 7 and batch_pad128 >= 256:
        # v7x has 2 TensorCores: make sure the (parallel) grid has >= 2 steps
        # so both cores get work; trades directly against "bigger tile".
        tile = min(tile, 128 * pl.cdiv(pl.cdiv(batch, 2), 128))
    grid = (pl.cdiv(batch, tile),)                           # ragged tail OK

    # MXU-operand weights in the compute dtype (cast once, outside the kernel).
    wh_c = wh.astype(compute_dtype)
    we_c = we.astype(compute_dtype)

    const = lambda i: (0, 0)         # weights/biases resident across grid steps
    const3 = lambda i: (0, 0, 0)

    # Rough VMEM footprint; only raise the scoped limit if tiles are huge
    # (matters on v5e whose scoped default is 16 MiB).
    weight_bytes = 4 * (w0.size + b0.size + wh.size + bh.size + we.size + be.size)
    est_vmem = (4 * tile * (2 * n_in + 2 * n_out + 8 * n_hidden)
                + 2 * weight_bytes)
    compiler_kwargs = dict(dimension_semantics=("parallel",))
    if est_vmem > 12 * 1024 * 1024:
        compiler_kwargs["vmem_limit_bytes"] = min(2 * est_vmem, 48 * 1024 * 1024)

    out_t = pl.pallas_call(
        _mlp_kernel,
        out_shape=jax.ShapeDtypeStruct((n_out, batch), x.dtype),
        grid=grid,
        in_specs=[
            pl.BlockSpec((n_in, tile), lambda i: (0, i)),             # x tile
            pl.BlockSpec((n_hidden, n_in), const),                    # w0
            pl.BlockSpec((n_hidden, 1), const),                       # b0
            pl.BlockSpec((n_hidden_layers, n_hidden, n_hidden), const3),  # wh
            pl.BlockSpec((n_hidden_layers, n_hidden, 1), const3),     # bh
            pl.BlockSpec((n_out, n_hidden), const),                   # we
            pl.BlockSpec((n_out, 1), const),                          # be
        ],
        out_specs=pl.BlockSpec((n_out, tile), lambda i: (0, i)),
        compiler_params=pltpu.CompilerParams(**compiler_kwargs),
    )(x_t, w0, b0, wh_c, bh, we_c, be)

    # Back to the PyTorch (batch, n_out) layout (trivial for n_out == 1).
    return out_t.T


def init_fcn_params(key, n_input, n_output, n_hidden, n_layers):
    """PyTorch nn.Linear-style init (uniform +/- 1/sqrt(fan_in)), W as (out, in)."""
    keys = jax.random.split(key, 6)

    def uni(k, shape, fan_in):
        bound = 1.0 / jnp.sqrt(jnp.float32(fan_in))
        return jax.random.uniform(k, shape, jnp.float32, -bound, bound)

    w0 = uni(keys[0], (n_hidden, n_input), n_input)
    b0 = uni(keys[1], (n_hidden, 1), n_input)
    wh = uni(keys[2], (n_layers - 1, n_hidden, n_hidden), n_hidden)
    bh = uni(keys[3], (n_layers - 1, n_hidden, 1), n_hidden)
    we = uni(keys[4], (n_output, n_hidden), n_hidden)
    be = uni(keys[5], (n_output, 1), n_hidden)
    return (w0, b0, wh, bh, we, be)


def fcn_reference(x, params):
    """Pure-JAX reference identical to the PyTorch module's forward."""
    w0, b0, wh, bh, we, be = params
    h = jnp.tanh(x @ w0.T + b0[:, 0])
    for l in range(wh.shape[0]):
        h = jnp.tanh(h @ wh[l].T + bh[l, :, 0])
    return h @ we.T + be[:, 0]


if __name__ == "__main__":
    # Shapes consistent with the PINN inverse problem: (x, t) -> scalar output,
    # hidden width 32, 4 layers total.
    N_INPUT, N_OUTPUT, N_HIDDEN, N_LAYERS = 2, 1, 32, 4

    key = jax.random.PRNGKey(0)
    k_x1, k_x2, k_x3, k_p = jax.random.split(key, 4)
    params = init_fcn_params(k_p, N_INPUT, N_OUTPUT, N_HIDDEN, N_LAYERS)

    # 1) Tiny batch (single partial 128-lane tile), f32 compute: exact match.
    x1 = jax.random.normal(k_x1, (8, N_INPUT), dtype=jnp.float32)
    o1 = jax.block_until_ready(fcn_forward(x1, params, compute_dtype=jnp.float32))
    r1 = fcn_reference(x1, params)
    assert o1.shape == (8, N_OUTPUT), o1.shape
    assert jnp.allclose(o1, r1, atol=1e-5, rtol=1e-5)

    # 2) Non-multiple-of-128 batch (ragged last block handled by Pallas,
    #    no wrapper pad), f32 compute, default tile.
    x2 = jax.random.normal(k_x2, (300, N_INPUT), dtype=jnp.float32)
    o2 = jax.block_until_ready(fcn_forward(x2, params, compute_dtype=jnp.float32))
    r2 = fcn_reference(x2, params)
    assert o2.shape == (300, N_OUTPUT), o2.shape
    assert jnp.allclose(o2, r2, atol=1e-5, rtol=1e-5)

    # 3) Multi-step grid + auto compute dtype (bf16 on v6e/v7x, f32 on v5e).
    #    bf16 forward tolerance is loose; validate against the end PINN task
    #    before relying on it for training.
    x3 = jax.random.normal(k_x3, (1024, N_INPUT), dtype=jnp.float32)
    o3 = jax.block_until_ready(fcn_forward(x3, params, tile_b=512))
    r3 = fcn_reference(x3, params)
    assert o3.shape == (1024, N_OUTPUT), o3.shape
    auto_bf16 = (_tpu_generation() or 0) >= 6
    tol = 1e-1 if auto_bf16 else 1e-5
    assert jnp.allclose(o3, r3, atol=tol, rtol=tol)

    # 4) Feature-major input path (no wrapper-side transpose HBM pass).
    o4 = jax.block_until_ready(
        fcn_forward(x2.T, params, compute_dtype=jnp.float32, x_feature_major=True))
    assert o4.shape == (300, N_OUTPUT), o4.shape
    assert jnp.allclose(o4, r2, atol=1e-5, rtol=1e-5)

    print("KERNEL_OK")
</pallas_src>

<mosaic_0001>
module attributes {stable_mosaic.version = 11 : i64} {
  func.func @_mlp_kernel(%arg0: i32, %arg1: memref<2x128xf32, #tpu.memory_space<vmem>>, %arg2: memref<32x2xf32, #tpu.memory_space<vmem>>, %arg3: memref<32x1xf32, #tpu.memory_space<vmem>>, %arg4: memref<3x32x32xf32, #tpu.memory_space<vmem>>, %arg5: memref<3x32x1xf32, #tpu.memory_space<vmem>>, %arg6: memref<1x32xf32, #tpu.memory_space<vmem>>, %arg7: memref<1x1xf32, #tpu.memory_space<vmem>>, %arg8: memref<1x128xf32, #tpu.memory_space<vmem>>) attributes {dimension_semantics = [#tpu.dimension_semantics<parallel>], iteration_bounds = array<i64: 1>, scalar_prefetch = 0 : i64, scratch_operands = 0 : i64, tpu.core_type = #tpu.core_type<tc>, window_params = [{transform_indices = @transform_0, window_bounds = array<i64: 2, 128>}, {pipeline_mode = #tpu.pipeline_mode<synchronous>, transform_indices = @transform_1, window_bounds = array<i64: 32, 2>}, {pipeline_mode = #tpu.pipeline_mode<synchronous>, transform_indices = @transform_2, window_bounds = array<i64: 32, 1>}, {pipeline_mode = #tpu.pipeline_mode<synchronous>, transform_indices = @transform_3, window_bounds = array<i64: 3, 32, 32>}, {pipeline_mode = #tpu.pipeline_mode<synchronous>, transform_indices = @transform_4, window_bounds = array<i64: 3, 32, 1>}, {pipeline_mode = #tpu.pipeline_mode<synchronous>, transform_indices = @transform_5, window_bounds = array<i64: 1, 32>}, {pipeline_mode = #tpu.pipeline_mode<synchronous>, transform_indices = @transform_6, window_bounds = array<i64: 1, 1>}, {transform_indices = @transform_7, window_bounds = array<i64: 1, 128>}]} {
    %c0 = arith.constant 0 : index
    %c0_0 = arith.constant 0 : index
    %0 = vector.load %arg1[%c0, %c0_0] : memref<2x128xf32, #tpu.memory_space<vmem>>, vector<2x128xf32>
    %c0_1 = arith.constant 0 : index
    %c0_2 = arith.constant 0 : index
    %1 = vector.load %arg2[%c0_1, %c0_2] : memref<32x2xf32, #tpu.memory_space<vmem>>, vector<32x2xf32>
    %c0_3 = arith.constant 0 : index
    %c0_4 = arith.constant 0 : index
    %2 = vector.load %arg3[%c0_3, %c0_4] : memref<32x1xf32, #tpu.memory_space<vmem>>, vector<32x1xf32>
    %3 = vector.extract_strided_slice %1 {offsets = [0, 0], sizes = [32, 1], strides = [1, 1]} : vector<32x2xf32> to vector<32x1xf32>
    %4 = vector.extract_strided_slice %0 {offsets = [0, 0], sizes = [1, 128], strides = [1, 1]} : vector<2x128xf32> to vector<1x128xf32>
    %5 = vector.broadcast %3 : vector<32x1xf32> to vector<32x128xf32>
    %6 = vector.broadcast %4 : vector<1x128xf32> to vector<32x128xf32>
    %7 = arith.mulf %5, %6 : vector<32x128xf32>
    %8 = vector.broadcast %2 : vector<32x1xf32> to vector<32x128xf32>
    %9 = arith.addf %8, %7 : vector<32x128xf32>
    %10 = vector.extract_strided_slice %1 {offsets = [0, 1], sizes = [32, 1], strides = [1, 1]} : vector<32x2xf32> to vector<32x1xf32>
    %11 = vector.extract_strided_slice %0 {offsets = [1, 0], sizes = [1, 128], strides = [1, 1]} : vector<2x128xf32> to vector<1x128xf32>
    %12 = vector.broadcast %10 : vector<32x1xf32> to vector<32x128xf32>
    %13 = vector.broadcast %11 : vector<1x128xf32> to vector<32x128xf32>
    %14 = arith.mulf %12, %13 : vector<32x128xf32>
    %15 = arith.addf %9, %14 : vector<32x128xf32>
    %16 = math.tanh %15 : vector<32x128xf32>
    %c0_5 = arith.constant 0 : index
    %c0_6 = arith.constant 0 : index
    %c0_7 = arith.constant 0 : index
    %17 = vector.load %arg4[%c0_5, %c0_6, %c0_7] : memref<3x32x32xf32, #tpu.memory_space<vmem>>, vector<1x32x32xf32>
    %18 = vector.shape_cast %17 : vector<1x32x32xf32> to vector<32x32xf32>
    %cst = arith.constant dense<0.000000e+00> : vector<32x128xf32>
    %19 = tpu.matmul %18, %16, %cst {dimension_numbers = #tpu.dot_dimension_numbers<[1], [0], [0], [1], [0, 0, 1, 1], [], []>} : vector<32x32xf32>, vector<32x128xf32>, vector<32x128xf32> -> vector<32x128xf32>
    %c0_8 = arith.constant 0 : index
    %c0_9 = arith.constant 0 : index
    %c0_10 = arith.constant 0 : index
    %20 = vector.load %arg5[%c0_8, %c0_9, %c0_10] : memref<3x32x1xf32, #tpu.memory_space<vmem>>, vector<1x32x1xf32>
    %21 = vector.shape_cast %20 : vector<1x32x1xf32> to vector<32x1xf32>
    %22 = vector.broadcast %21 : vector<32x1xf32> to vector<32x128xf32>
    %23 = arith.addf %19, %22 : vector<32x128xf32>
    %24 = math.tanh %23 : vector<32x128xf32>
    %c1 = arith.constant 1 : index
    %c0_11 = arith.constant 0 : index
    %c0_12 = arith.constant 0 : index
    %25 = vector.load %arg4[%c1, %c0_11, %c0_12] : memref<3x32x32xf32, #tpu.memory_space<vmem>>, vector<1x32x32xf32>
    %26 = vector.shape_cast %25 : vector<1x32x32xf32> to vector<32x32xf32>
    %cst_13 = arith.constant dense<0.000000e+00> : vector<32x128xf32>
    %27 = tpu.matmul %26, %24, %cst_13 {dimension_numbers = #tpu.dot_dimension_numbers<[1], [0], [0], [1], [0, 0, 1, 1], [], []>} : vector<32x32xf32>, vector<32x128xf32>, vector<32x128xf32> -> vector<32x128xf32>
    %c1_14 = arith.constant 1 : index
    %c0_15 = arith.constant 0 : index
    %c0_16 = arith.constant 0 : index
    %28 = vector.load %arg5[%c1_14, %c0_15, %c0_16] : memref<3x32x1xf32, #tpu.memory_space<vmem>>, vector<1x32x1xf32>
    %29 = vector.shape_cast %28 : vector<1x32x1xf32> to vector<32x1xf32>
    %30 = vector.broadcast %29 : vector<32x1xf32> to vector<32x128xf32>
    %31 = arith.addf %27, %30 : vector<32x128xf32>
    %32 = math.tanh %31 : vector<32x128xf32>
    %c2 = arith.constant 2 : index
    %c0_17 = arith.constant 0 : index
    %c0_18 = arith.constant 0 : index
    %33 = vector.load %arg4[%c2, %c0_17, %c0_18] : memref<3x32x32xf32, #tpu.memory_space<vmem>>, vector<1x32x32xf32>
    %34 = vector.shape_cast %33 : vector<1x32x32xf32> to vector<32x32xf32>
    %cst_19 = arith.constant dense<0.000000e+00> : vector<32x128xf32>
    %35 = tpu.matmul %34, %32, %cst_19 {dimension_numbers = #tpu.dot_dimension_numbers<[1], [0], [0], [1], [0, 0, 1, 1], [], []>} : vector<32x32xf32>, vector<32x128xf32>, vector<32x128xf32> -> vector<32x128xf32>
    %c2_20 = arith.constant 2 : index
    %c0_21 = arith.constant 0 : index
    %c0_22 = arith.constant 0 : index
    %36 = vector.load %arg5[%c2_20, %c0_21, %c0_22] : memref<3x32x1xf32, #tpu.memory_space<vmem>>, vector<1x32x1xf32>
    %37 = vector.shape_cast %36 : vector<1x32x1xf32> to vector<32x1xf32>
    %38 = vector.broadcast %37 : vector<32x1xf32> to vector<32x128xf32>
    %39 = arith.addf %35, %38 : vector<32x128xf32>
    %40 = math.tanh %39 : vector<32x128xf32>
    %c0_23 = arith.constant 0 : index
    %c0_24 = arith.constant 0 : index
    %41 = vector.load %arg6[%c0_23, %c0_24] : memref<1x32xf32, #tpu.memory_space<vmem>>, vector<1x32xf32>
    %cst_25 = arith.constant dense<0.000000e+00> : vector<1x128xf32>
    %42 = tpu.matmul %41, %40, %cst_25 {dimension_numbers = #tpu.dot_dimension_numbers<[1], [0], [0], [1], [0, 0, 1, 1], [], []>} : vector<1x32xf32>, vector<32x128xf32>, vector<1x128xf32> -> vector<1x128xf32>
    %c0_26 = arith.constant 0 : index
    %c0_27 = arith.constant 0 : index
    %43 = vector.load %arg7[%c0_26, %c0_27] : memref<1x1xf32, #tpu.memory_space<vmem>>, vector<1x1xf32>
    %44 = vector.broadcast %43 : vector<1x1xf32> to vector<1x128xf32>
    %45 = arith.addf %42, %44 : vector<1x128xf32>
    %c0_28 = arith.constant 0 : index
    %c0_29 = arith.constant 0 : index
    %46 = vector.load %arg8[%c0_28, %c0_29] : memref<1x128xf32, #tpu.memory_space<vmem>>, vector<1x128xf32>
    tpu.vector_store %arg8[%c0_28, %c0_29], %45 {strides = array<i32>} : memref<1x128xf32, #tpu.memory_space<vmem>>, vector<1x128xf32>,
    return
  }
  func.func @transform_0(%arg0: i32) -> (i32, i32) {
    %c0_i32 = arith.constant 0 : i32
    %c0_i32_0 = arith.constant 0 : i32
    return %c0_i32, %arg0 : i32, i32
  }
  func.func @transform_1(%arg0: i32) -> (i32, i32) {
    %c0_i32 = arith.constant 0 : i32
    %c0_i32_0 = arith.constant 0 : i32
    %c0_i32_1 = arith.constant 0 : i32
    return %c0_i32, %c0_i32_0 : i32, i32
  }
  func.func @transform_2(%arg0: i32) -> (i32, i32) {
    %c0_i32 = arith.constant 0 : i32
    %c0_i32_0 = arith.constant 0 : i32
    %c0_i32_1 = arith.constant 0 : i32
    return %c0_i32, %c0_i32_0 : i32, i32
  }
  func.func @transform_3(%arg0: i32) -> (i32, i32, i32) {
    %c0_i32 = arith.constant 0 : i32
    %c0_i32_0 = arith.constant 0 : i32
    %c0_i32_1 = arith.constant 0 : i32
    %c0_i32_2 = arith.constant 0 : i32
    return %c0_i32, %c0_i32_0, %c0_i32_1 : i32, i32, i32
  }
  func.func @transform_4(%arg0: i32) -> (i32, i32, i32) {
    %c0_i32 = arith.constant 0 : i32
    %c0_i32_0 = arith.constant 0 : i32
    %c0_i32_1 = arith.constant 0 : i32
    %c0_i32_2 = arith.constant 0 : i32
    return %c0_i32, %c0_i32_0, %c0_i32_1 : i32, i32, i32
  }
  func.func @transform_5(%arg0: i32) -> (i32, i32) {
    %c0_i32 = arith.constant 0 : i32
    %c0_i32_0 = arith.constant 0 : i32
    %c0_i32_1 = arith.constant 0 : i32
    return %c0_i32, %c0_i32_0 : i32, i32
  }
  func.func @transform_6(%arg0: i32) -> (i32, i32) {
    %c0_i32 = arith.constant 0 : i32
    %c0_i32_0 = arith.constant 0 : i32
    %c0_i32_1 = arith.constant 0 : i32
    return %c0_i32, %c0_i32_0 : i32, i32
  }
  func.func @transform_7(%arg0: i32) -> (i32, i32) {
    %c0_i32 = arith.constant 0 : i32
    %c0_i32_0 = arith.constant 0 : i32
    return %c0_i32, %arg0 : i32, i32
  }
}

</mosaic_0001>

<llo_original>
// kernel: tpu_custom_call.1
$region0: #{tpu_custom_call.1}
  #allocation0 [shape = 'u32[]', space=smem, size = 0x4, offset = 0x4, fixed_abs, tag = 'smem constant byte address 0x4 - core index']
  #allocation1 [shape = 'u32[144,128]{1,0:T(1,128)}', space=vmem, size = 0x12000, scoped, tag = 'internal scratch']
  #allocation2 [shape = 'f32[1,1]{1,0:T(1,128)S(1)}', space=vmem, size = 0x200, scoped, tag = 'scoped memory for tpu_custom_call.1']
  %s0 = inlined_call_operand.vmem [shape: f32[2,8], index: 0, kind: input, shape index: {}]
  %s1 = inlined_call_operand.vmem [shape: f32[32,2], index: 1, kind: input, shape index: {}]
  %s2 = inlined_call_operand.vmem [shape: f32[32,1], index: 2, kind: input, shape index: {}]
  %s3 = inlined_call_operand.vmem [shape: f32[3,32,32], index: 3, kind: input, shape index: {}]
  %s4 = inlined_call_operand.vmem [shape: f32[3,32,1], index: 4, kind: input, shape index: {}]
  %s5 = inlined_call_operand.vmem [shape: f32[1,32], index: 5, kind: input, shape index: {}]
  %s6 = inlined_call_operand.<no memory space> [shape: f32[1,1], index: 6, kind: input, shape index: {}]
  %s7 = inlined_call_operand.hbm [shape: f32[1,8], index: 7, kind: output, shape index: {}]
  %s8 = sld [smem:[#allocation0]]
  $region38: #{tpu_custom_call.1} parent=0
    _
  %s10 = ssub.s32 1, %s8
  %s11 = scalar_select 0, %s10, %s8
  %v12 = vstv %s6
  %13 = vst [vmem:[#allocation2] sm:$0x1] %v12
  $region1: #{tpu_custom_call.1} parent=0
    #allocation3 [shape = 'u8[512]{0}', space=vmem, size = 0x400, scoped, tag = 'output window, operand 0, single buffered']
    #allocation4 [shape = 's32[1]{0}', space=sflag, size = 0x4, scoped, tag = 'scoped memory for tpu_custom_call.1']
    %14 = vsyncpa [#allocation4], 0
    // Predicated region
    $region2: #{tpu_custom_call.1} parent=1 // pred_check
      _
    $region3: #{tpu_custom_call.1} parent=1 // pred_check_branch
      %16 = sbr.rel (0) target = $region5
    $region4: #{tpu_custom_call.1} parent=1 // pred_region
      _
    $region5: #{tpu_custom_call.1} parent=1 // pred_fallthru
      _
    // Predicated region
    $region6: #{tpu_custom_call.1} parent=1 // pred_check
      _
    $region7: #{tpu_custom_call.1} parent=1 // pred_check_branch
      %18 = sbr.rel (0) target = $region9
    $region8: #{tpu_custom_call.1} parent=1 // pred_region
      _
    $region9: #{tpu_custom_call.1} parent=1 // pred_fallthru
      _
    // Predicated region
    $region10: #{tpu_custom_call.1} parent=1 // pred_check
      _
    $region11: #{tpu_custom_call.1} parent=1 // pred_check_branch
      %20 = sbr.rel (0) target = $region13
    $region12: #{tpu_custom_call.1} parent=1 // pred_region
      _
    $region13: #{tpu_custom_call.1} parent=1 // pred_fallthru
      _
    // Predicated region
    $region14: #{tpu_custom_call.1} parent=1 // pred_check
      _
    $region15: #{tpu_custom_call.1} parent=1 // pred_check_branch
      %22 = sbr.rel (0) target = $region17
    $region16: #{tpu_custom_call.1} parent=1 // pred_region
      _
    $region17: #{tpu_custom_call.1} parent=1 // pred_fallthru
      _
    // Predicated region
    $region18: #{tpu_custom_call.1} parent=1 // pred_check
      _
    $region19: #{tpu_custom_call.1} parent=1 // pred_check_branch
      %24 = sbr.rel (0) target = $region21
    $region20: #{tpu_custom_call.1} parent=1 // pred_region
      _
    $region21: #{tpu_custom_call.1} parent=1 // pred_fallthru
      _
    // Predicated region
    $region22: #{tpu_custom_call.1} parent=1 // pred_check
      _
    $region23: #{tpu_custom_call.1} parent=1 // pred_check_branch
      %26 = sbr.rel (0) target = $region25
    $region24: #{tpu_custom_call.1} parent=1 // pred_region
      _
    $region25: #{tpu_custom_call.1} parent=1 // pred_fallthru
      _
    // Predicated region
    $region26: #{tpu_custom_call.1} parent=1 // pred_check
      _
    $region27: #{tpu_custom_call.1} parent=1 // pred_check_branch
      %28 = sbr.rel (0) target = $region29
    $region28: #{tpu_custom_call.1} parent=1 // pred_region
      _
    $region29: #{tpu_custom_call.1} parent=1 // pred_fallthru
      _
    %v29 = vld [vmem:[%s0] sm:$0x3]
    %v30 = vld [vmem:[%s1] sm:$0xff]
    %v31 = vld [vmem:[%s1 + $0x8] sm:$0xff]
    %v32 = vld [vmem:[%s1 + $0x10] sm:$0xff]
    %v33 = vld [vmem:[%s1 + $0x18] sm:$0xff]
    %v34 = vld [vmem:[%s2] sm:$0xff]
    %v35 = vld [vmem:[%s2 + $0x8] sm:$0xff]
    %v36 = vld [vmem:[%s2 + $0x10] sm:$0xff]
    %v37 = vld [vmem:[%s2 + $0x18] sm:$0xff]
    %39 = vset.pattern.permute.xlu0 0
    %40 = vperm.xlu0 %39, %v30
    %v41 = vpop.permute.xlu0 %40
    %44 = vset.pattern.permute.xlu0 0
    %45 = vperm.xlu0 %44, %v31
    %v46 = vpop.permute.xlu0 %45
    %49 = vset.pattern.permute.xlu0 0
    %50 = vperm.xlu0 %49, %v32
    %v51 = vpop.permute.xlu0 %50
    %54 = vset.pattern.permute.xlu0 0
    %55 = vperm.xlu0 %54, %v33
    %v56 = vpop.permute.xlu0 %55
    %v58 = vlaneseq
    %v59 = vshrl.u32 %v58, 7
    %v60 = vsub.s32 0, %v59
    %v61 = vrot.slane %v29, %v60
    %v62 = vmul.f32 %v41, %v61
    %v63 = vmul.f32 %v46, %v61
    %v64 = vmul.f32 %v51, %v61
    %v65 = vmul.f32 %v56, %v61
    %67 = vset.pattern.permute.xlu0 0
    %68 = vperm.xlu0 %67, %v34
    %v69 = vpop.permute.xlu0 %68
    %72 = vset.pattern.permute.xlu0 0
    %73 = vperm.xlu0 %72, %v35
    %v74 = vpop.permute.xlu0 %73
    %77 = vset.pattern.permute.xlu0 0
    %78 = vperm.xlu0 %77, %v36
    %v79 = vpop.permute.xlu0 %78
    %82 = vset.pattern.permute.xlu0 0
    %83 = vperm.xlu0 %82, %v37
    %v84 = vpop.permute.xlu0 %83
    %v86 = vadd.f32 %v69, %v62
    %v87 = vadd.f32 %v74, %v63
    %v88 = vadd.f32 %v79, %v64
    %v89 = vadd.f32 %v84, %v65
    %90 = vset.pattern.permute.xlu0 1
    %91 = vperm.xlu0 %90, %v30
    %v92 = vpop.permute.xlu0 %91
    %94 = vset.pattern.permute.xlu0 1
    %95 = vperm.xlu0 %94, %v31
    %v96 = vpop.permute.xlu0 %95
    %98 = vset.pattern.permute.xlu0 1
    %99 = vperm.xlu0 %98, %v32
    %v100 = vpop.permute.xlu0 %99
    %102 = vset.pattern.permute.xlu0 1
    %103 = vperm.xlu0 %102, %v33
    %v104 = vpop.permute.xlu0 %103
    %v106 = vlaneseq
    %v107 = vshrl.u32 %v106, 7
    %v108 = vsub.s32 1, %v107
    %v109 = vrot.slane %v29, %v108
    %v110 = vmul.f32 %v92, %v109
    %v111 = vmul.f32 %v96, %v109
    %v112 = vmul.f32 %v100, %v109
    %v113 = vmul.f32 %v104, %v109
    %v114 = vadd.f32 %v86, %v110
    %v115 = vadd.f32 %v87, %v111
    %v116 = vadd.f32 %v88, %v112
    %v117 = vadd.f32 %v89, %v113
    %v118 = vtanh.pop %v114
    %v119 = vtanh.pop %v115
    %v120 = vtanh.pop %v116
    %v121 = vtanh.pop %v117
    %v122 = vld [vmem:[%s3] sm:$0xff]
    %v123 = vld [vmem:[%s3 + $0x8] sm:$0xff]
    %v124 = vld [vmem:[%s3 + $0x10] sm:$0xff]
    %v125 = vld [vmem:[%s3 + $0x18] sm:$0xff]
    %v126 = vld [vmem:[%s4] sm:$0xff]
    %v127 = vld [vmem:[%s4 + $0x8] sm:$0xff]
    %v128 = vld [vmem:[%s4 + $0x10] sm:$0xff]
    %v129 = vld [vmem:[%s4 + $0x18] sm:$0xff]
    %131 = vset.pattern.permute.xlu0 0
    %132 = vperm.xlu0 %131, %v126
    %v133 = vpop.permute.xlu0 %132
    %136 = vset.pattern.permute.xlu0 0
    %137 = vperm.xlu0 %136, %v127
    %v138 = vpop.permute.xlu0 %137
    %141 = vset.pattern.permute.xlu0 0
    %142 = vperm.xlu0 %141, %v128
    %v143 = vpop.permute.xlu0 %142
    %146 = vset.pattern.permute.xlu0 0
    %147 = vperm.xlu0 %146, %v129
    %v148 = vpop.permute.xlu0 %147
    %vm150 = vcmask 261120
    %v152 = vsel %vm150, %v122, 0
    %v155 = vsel %vm150, %v123, 0
    %v158 = vsel %vm150, %v124, 0
    %v161 = vsel %vm150, %v125, 0
    %163 = vmatprep.subr.mxu0 0.0
    %164 = vmatpush1.msra.mxu0 %v118
    %165 = vmatprep.subr.mxu0 0.0
    %166 = vmatpush1.msra.mxu0 %v119
    %167 = vmatprep.subr.mxu0 0.0
    %168 = vmatpush1.msra.mxu0 %v120
    %169 = vmatprep.subr.mxu0 0.0
    %170 = vmatpush1.msra.mxu0 %v121
    %171 = vmatprep.subr.mxu0 0.0
    %172 = vmatpush1.msra.mxu0 0.0
    %173 = vmatprep.subr.mxu0 0.0
    %174 = vmatpush1.msra.mxu0 0.0
    %175 = vmatprep.subr.mxu0 0.0
    %176 = vmatpush1.msra.mxu0 0.0
    %177 = vmatprep.subr.mxu0 0.0
    %178 = vmatpush1.msra.mxu0 0.0
    %179 = vmatprep.subr.mxu0 0.0
    %180 = vmatpush1.msra.mxu0 0.0
    %181 = vmatprep.subr.mxu0 0.0
    %182 = vmatpush1.msra.mxu0 0.0
    %183 = vmatprep.subr.mxu0 0.0
    %184 = vmatpush1.msra.mxu0 0.0
    %185 = vmatprep.subr.mxu0 0.0
    %186 = vmatpush1.msra.mxu0 0.0
    %187 = vmatprep.subr.mxu0 0.0
    %188 = vmatpush1.msra.mxu0 0.0
    %189 = vmatprep.subr.mxu0 0.0
    %190 = vmatpush1.msra.mxu0 0.0
    %191 = vmatprep.subr.mxu0 0.0
    %192 = vmatpush1.msra.mxu0 0.0
    %193 = vmatprep.subr.mxu0 0.0
    %194 = vmatpush1.msra.mxu0 0.0
    %195 = vmatprep.subr.mxu0 0.0
    %196 = vmatpush1.msra.mxu0 0.0
    %197 = vmatprep.subr.mxu0 0.0
    %198 = vmatpush1.msra.mxu0 0.0
    %199 = vmatprep.subr.mxu0 0.0
    %200 = vmatpush1.msra.mxu0 0.0
    %201 = vmatprep.subr.mxu0 0.0
    %202 = vmatpush1.msra.mxu0 0.0
    %203 = vmatprep.subr.mxu0 0.0
    %204 = vmatpush1.msra.mxu0 0.0
    %205 = vmatprep.subr.mxu0 0.0
    %206 = vmatpush1.msra.mxu0 0.0
    %207 = vmatprep.subr.mxu0 0.0
    %208 = vmatpush1.msra.mxu0 0.0
    %209 = vmatprep.subr.mxu0 0.0
    %210 = vmatpush1.msra.mxu0 0.0
    %211 = vmatprep.subr.mxu0 0.0
    %212 = vmatpush1.msra.mxu0 0.0
    %213 = vmatprep.subr.mxu0 0.0
    %214 = vmatpush1.msra.mxu0 0.0
    %215 = vmatprep.subr.mxu0 0.0
    %216 = vmatpush1.msra.mxu0 0.0
    %217 = vmatprep.subr.mxu0 0.0
    %218 = vmatpush1.msra.mxu0 0.0
    %219 = vmatprep.subr.mxu0 0.0
    %220 = vmatpush1.msra.mxu0 0.0
    %221 = vmatprep.subr.mxu0 0.0
    %222 = vmatpush1.msra.mxu0 0.0
    %223 = vmatprep.subr.mxu0 0.0
    %224 = vmatpush1.msra.mxu0 0.0
    %225 = vmatprep.subr.mxu0 0.0
    %226 = vmatpush1.msra.mxu0 0.0
    %227 = vmatprep.mubr.f32.mxu0 0.0
    %228 = vmatmul.mubr.f32.gmra.mrb[0].mxu0 %v152
    %v229 = vpop.f32.mrb[0].mxu0
    %v230 = vadd.f32 %v133, %v229
    %v231 = vpop.f32.mrb[0].mxu0
    %232 = vmatprep.mubr.f32.mxu0 0.0
    %233 = vmatmul.mubr.f32.gmra.mrb[0].mxu0 %v155
    %v234 = vpop.f32.mrb[0].mxu0
    %v235 = vadd.f32 %v138, %v234
    %v236 = vpop.f32.mrb[0].mxu0
    %237 = vmatprep.mubr.f32.mxu0 0.0
    %238 = vmatmul.mubr.f32.gmra.mrb[0].mxu0 %v158
    %v239 = vpop.f32.mrb[0].mxu0
    %v240 = vadd.f32 %v143, %v239
    %v241 = vpop.f32.mrb[0].mxu0
    %242 = vmatprep.mubr.f32.mxu0 0.0
    %243 = vmatmul.mubr.f32.gmra.mrb[0].mxu0 %v161
    %v244 = vpop.f32.mrb[0].mxu0
    %v245 = vadd.f32 %v148, %v244
    %v246 = vpop.f32.mrb[0].mxu0
    %247 = vdwg.mxu0
    %v248 = vtanh.pop %v230
    %v249 = vtanh.pop %v235
    %v250 = vtanh.pop %v240
    %v251 = vtanh.pop %v245
    %s252 = scalar_lea.vmem %s3, 32
    %v253 = vld [vmem:[%s252] sm:$0xff]
    %v254 = vld [vmem:[%s252 + $0x8] sm:$0xff]
    %v255 = vld [vmem:[%s252 + $0x10] sm:$0xff]
    %v256 = vld [vmem:[%s252 + $0x18] sm:$0xff]
    %s257 = scalar_lea.vmem %s4, 32
    %v258 = vld [vmem:[%s257] sm:$0xff]
    %v259 = vld [vmem:[%s257 + $0x8] sm:$0xff]
    %v260 = vld [vmem:[%s257 + $0x10] sm:$0xff]
    %v261 = vld [vmem:[%s257 + $0x18] sm:$0xff]
    %263 = vset.pattern.permute.xlu0 0
    %264 = vperm.xlu0 %263, %v258
    %v265 = vpop.permute.xlu0 %264
    %268 = vset.pattern.permute.xlu0 0
    %269 = vperm.xlu0 %268, %v259
    %v270 = vpop.permute.xlu0 %269
    %273 = vset.pattern.permute.xlu0 0
    %274 = vperm.xlu0 %273, %v260
    %v275 = vpop.permute.xlu0 %274
    %278 = vset.pattern.permute.xlu0 0
    %279 = vperm.xlu0 %278, %v261
    %v280 = vpop.permute.xlu0 %279
    %v283 = vsel %vm150, %v253, 0
    %v286 = vsel %vm150, %v254, 0
    %v289 = vsel %vm150, %v255, 0
    %v292 = vsel %vm150, %v256, 0
    %294 = vmatprep.subr.mxu0 0.0
    %295 = vmatpush1.msra.mxu0 %v248
    %296 = vmatprep.subr.mxu0 0.0
    %297 = vmatpush1.msra.mxu0 %v249
    %298 = vmatprep.subr.mxu0 0.0
    %299 = vmatpush1.msra.mxu0 %v250
    %300 = vmatprep.subr.mxu0 0.0
    %301 = vmatpush1.msra.mxu0 %v251
    %302 = vmatprep.subr.mxu0 0.0
    %303 = vmatpush1.msra.mxu0 0.0
    %304 = vmatprep.subr.mxu0 0.0
    %305 = vmatpush1.msra.mxu0 0.0
    %306 = vmatprep.subr.mxu0 0.0
    %307 = vmatpush1.msra.mxu0 0.0
    %308 = vmatprep.subr.mxu0 0.0
    %309 = vmatpush1.msra.mxu0 0.0
    %310 = vmatprep.subr.mxu0 0.0
    %311 = vmatpush1.msra.mxu0 0.0
    %312 = vmatprep.subr.mxu0 0.0
    %313 = vmatpush1.msra.mxu0 0.0
    %314 = vmatprep.subr.mxu0 0.0
    %315 = vmatpush1.msra.mxu0 0.0
    %316 = vmatprep.subr.mxu0 0.0
    %317 = vmatpush1.msra.mxu0 0.0
    %318 = vmatprep.subr.mxu0 0.0
    %319 = vmatpush1.msra.mxu0 0.0
    %320 = vmatprep.subr.mxu0 0.0
    %321 = vmatpush1.msra.mxu0 0.0
    %322 = vmatprep.subr.mxu0 0.0
    %323 = vmatpush1.msra.mxu0 0.0
    %324 = vmatprep.subr.mxu0 0.0
    %325 = vmatpush1.msra.mxu0 0.0
    %326 = vmatprep.subr.mxu0 0.0
    %327 = vmatpush1.msra.mxu0 0.0
    %328 = vmatprep.subr.mxu0 0.0
    %329 = vmatpush1.msra.mxu0 0.0
    %330 = vmatprep.subr.mxu0 0.0
    %331 = vmatpush1.msra.mxu0 0.0
    %332 = vmatprep.subr.mxu0 0.0
    %333 = vmatpush1.msra.mxu0 0.0
    %334 = vmatprep.subr.mxu0 0.0
    %335 = vmatpush1.msra.mxu0 0.0
    %336 = vmatprep.subr.mxu0 0.0
    %337 = vmatpush1.msra.mxu0 0.0
    %338 = vmatprep.subr.mxu0 0.0
    %339 = vmatpush1.msra.mxu0 0.0
    %340 = vmatprep.subr.mxu0 0.0
    %341 = vmatpush1.msra.mxu0 0.0
    %342 = vmatprep.subr.mxu0 0.0
    %343 = vmatpush1.msra.mxu0 0.0
    %344 = vmatprep.subr.mxu0 0.0
    %345 = vmatpush1.msra.mxu0 0.0
    %346 = vmatprep.subr.mxu0 0.0
    %347 = vmatpush1.msra.mxu0 0.0
    %348 = vmatprep.subr.mxu0 0.0
    %349 = vmatpush1.msra.mxu0 0.0
    %350 = vmatprep.subr.mxu0 0.0
    %351 = vmatpush1.msra.mxu0 0.0
    %352 = vmatprep.subr.mxu0 0.0
    %353 = vmatpush1.msra.mxu0 0.0
    %354 = vmatprep.subr.mxu0 0.0
    %355 = vmatpush1.msra.mxu0 0.0
    %356 = vmatprep.subr.mxu0 0.0
    %357 = vmatpush1.msra.mxu0 0.0
    %358 = vmatprep.mubr.f32.mxu0 0.0
    %359 = vmatmul.mubr.f32.gmra.mrb[0].mxu0 %v283
    %v360 = vpop.f32.mrb[0].mxu0
    %v361 = vadd.f32 %v265, %v360
    %v362 = vpop.f32.mrb[0].mxu0
    %363 = vmatprep.mubr.f32.mxu0 0.0
    %364 = vmatmul.mubr.f32.gmra.mrb[0].mxu0 %v286
    %v365 = vpop.f32.mrb[0].mxu0
    %v366 = vadd.f32 %v270, %v365
    %v367 = vpop.f32.mrb[0].mxu0
    %368 = vmatprep.mubr.f32.mxu0 0.0
    %369 = vmatmul.mubr.f32.gmra.mrb[0].mxu0 %v289
    %v370 = vpop.f32.mrb[0].mxu0
    %v371 = vadd.f32 %v275, %v370
    %v372 = vpop.f32.mrb[0].mxu0
    %373 = vmatprep.mubr.f32.mxu0 0.0
    %374 = vmatmul.mubr.f32.gmra.mrb[0].mxu0 %v292
    %v375 = vpop.f32.mrb[0].mxu0
    %v376 = vadd.f32 %v280, %v375
    %v377 = vpop.f32.mrb[0].mxu0
    %378 = vdwg.mxu0
    %v379 = vtanh.pop %v361
    %v380 = vtanh.pop %v366
    %v381 = vtanh.pop %v371
    %v382 = vtanh.pop %v376
    %s383 = scalar_lea.vmem %s3, 64
    %v384 = vld [vmem:[%s383] sm:$0xff]
    %v385 = vld [vmem:[%s383 + $0x8] sm:$0xff]
    %v386 = vld [vmem:[%s383 + $0x10] sm:$0xff]
    %v387 = vld [vmem:[%s383 + $0x18] sm:$0xff]
    %s388 = scalar_lea.vmem %s4, 64
    %v389 = vld [vmem:[%s388] sm:$0xff]
    %v390 = vld [vmem:[%s388 + $0x8] sm:$0xff]
    %v391 = vld [vmem:[%s388 + $0x10] sm:$0xff]
    %v392 = vld [vmem:[%s388 + $0x18] sm:$0xff]
    %394 = vset.pattern.permute.xlu0 0
    %395 = vperm.xlu0 %394, %v389
    %v396 = vpop.permute.xlu0 %395
    %399 = vset.pattern.permute.xlu0 0
    %400 = vperm.xlu0 %399, %v390
    %v401 = vpop.permute.xlu0 %400
    %404 = vset.pattern.permute.xlu0 0
    %405 = vperm.xlu0 %404, %v391
    %v406 = vpop.permute.xlu0 %405
    %409 = vset.pattern.permute.xlu0 0
    %410 = vperm.xlu0 %409, %v392
    %v411 = vpop.permute.xlu0 %410
    %v414 = vsel %vm150, %v384, 0
    %v417 = vsel %vm150, %v385, 0
    %v420 = vsel %vm150, %v386, 0
    %v423 = vsel %vm150, %v387, 0
    %425 = vmatprep.subr.mxu0 0.0
    %426 = vmatpush1.msra.mxu0 %v379
    %427 = vmatprep.subr.mxu0 0.0
    %428 = vmatpush1.msra.mxu0 %v380
    %429 = vmatprep.subr.mxu0 0.0
    %430 = vmatpush1.msra.mxu0 %v381
    %431 = vmatprep.subr.mxu0 0.0
    %432 = vmatpush1.msra.mxu0 %v382
    %433 = vmatprep.subr.mxu0 0.0
    %434 = vmatpush1.msra.mxu0 0.0
    %435 = vmatprep.subr.mxu0 0.0
    %436 = vmatpush1.msra.mxu0 0.0
    %437 = vmatprep.subr.mxu0 0.0
    %438 = vmatpush1.msra.mxu0 0.0
    %439 = vmatprep.subr.mxu0 0.0
    %440 = vmatpush1.msra.mxu0 0.0
    %441 = vmatprep.subr.mxu0 0.0
    %442 = vmatpush1.msra.mxu0 0.0
    %443 = vmatprep.subr.mxu0 0.0
    %444 = vmatpush1.msra.mxu0 0.0
    %445 = vmatprep.subr.mxu0 0.0
    %446 = vmatpush1.msra.mxu0 0.0
    %447 = vmatprep.subr.mxu0 0.0
    %448 = vmatpush1.msra.mxu0 0.0
    %449 = vmatprep.subr.mxu0 0.0
    %450 = vmatpush1.msra.mxu0 0.0
    %451 = vmatprep.subr.mxu0 0.0
    %452 = vmatpush1.msra.mxu0 0.0
    %453 = vmatprep.subr.mxu0 0.0
    %454 = vmatpush1.msra.mxu0 0.0
    %455 = vmatprep.subr.mxu0 0.0
    %456 = vmatpush1.msra.mxu0 0.0
    %457 = vmatprep.subr.mxu0 0.0
    %458 = vmatpush1.msra.mxu0 0.0
    %459 = vmatprep.subr.mxu0 0.0
    %460 = vmatpush1.msra.mxu0 0.0
    %461 = vmatprep.subr.mxu0 0.0
    %462 = vmatpush1.msra.mxu0 0.0
    %463 = vmatprep.subr.mxu0 0.0
    %464 = vmatpush1.msra.mxu0 0.0
    %465 = vmatprep.subr.mxu0 0.0
    %466 = vmatpush1.msra.mxu0 0.0
    %467 = vmatprep.subr.mxu0 0.0
    %468 = vmatpush1.msra.mxu0 0.0
    %469 = vmatprep.subr.mxu0 0.0
    %470 = vmatpush1.msra.mxu0 0.0
    %471 = vmatprep.subr.mxu0 0.0
    %472 = vmatpush1.msra.mxu0 0.0
    %473 = vmatprep.subr.mxu0 0.0
    %474 = vmatpush1.msra.mxu0 0.0
    %475 = vmatprep.subr.mxu0 0.0
    %476 = vmatpush1.msra.mxu0 0.0
    %477 = vmatprep.subr.mxu0 0.0
    %478 = vmatpush1.msra.mxu0 0.0
    %479 = vmatprep.subr.mxu0 0.0
    %480 = vmatpush1.msra.mxu0 0.0
    %481 = vmatprep.subr.mxu0 0.0
    %482 = vmatpush1.msra.mxu0 0.0
    %483 = vmatprep.subr.mxu0 0.0
    %484 = vmatpush1.msra.mxu0 0.0
    %485 = vmatprep.subr.mxu0 0.0
    %486 = vmatpush1.msra.mxu0 0.0
    %487 = vmatprep.subr.mxu0 0.0
    %488 = vmatpush1.msra.mxu0 0.0
    %489 = vmatprep.mubr.f32.mxu0 0.0
    %490 = vmatmul.mubr.f32.gmra.mrb[0].mxu0 %v414
    %v491 = vpop.f32.mrb[0].mxu0
    %v492 = vadd.f32 %v396, %v491
    %v493 = vpop.f32.mrb[0].mxu0
    %494 = vmatprep.mubr.f32.mxu0 0.0
    %495 = vmatmul.mubr.f32.gmra.mrb[0].mxu0 %v417
    %v496 = vpop.f32.mrb[0].mxu0
    %v497 = vadd.f32 %v401, %v496
    %v498 = vpop.f32.mrb[0].mxu0
    %499 = vmatprep.mubr.f32.mxu0 0.0
    %500 = vmatmul.mubr.f32.gmra.mrb[0].mxu0 %v420
    %v501 = vpop.f32.mrb[0].mxu0
    %v502 = vadd.f32 %v406, %v501
    %v503 = vpop.f32.mrb[0].mxu0
    %504 = vmatprep.mubr.f32.mxu0 0.0
    %505 = vmatmul.mubr.f32.gmra.mrb[0].mxu0 %v423
    %v506 = vpop.f32.mrb[0].mxu0
    %v507 = vadd.f32 %v411, %v506
    %v508 = vpop.f32.mrb[0].mxu0
    %509 = vdwg.mxu0
    %v510 = vtanh.pop %v492
    %v511 = vtanh.pop %v497
    %v512 = vtanh.pop %v502
    %v513 = vtanh.pop %v507
    %v514 = vld [vmem:[%s5] sm:$0x1]
    %v515 = vld [vmem:[#allocation2] sm:$0x1]
    %517 = vset.pattern.permute.xlu0 0
    %518 = vperm.xlu0 %517, %v515
    %v519 = vpop.permute.xlu0 %518
    %v521 = vlaneseq
    %v522 = vshrl.u32 %v521, 7
    %v523 = vsub.s32 0, %v522
    %v524 = vrot.slane %v519, %v523
    %v526 = vsel %vm150, %v514, 0
    %528 = vmatprep.subr.mxu0 0.0
    %529 = vmatpush1.msra.mxu0 %v510
    %530 = vmatprep.subr.mxu0 0.0
    %531 = vmatpush1.msra.mxu0 %v511
    %532 = vmatprep.subr.mxu0 0.0
    %533 = vmatpush1.msra.mxu0 %v512
    %534 = vmatprep.subr.mxu0 0.0
    %535 = vmatpush1.msra.mxu0 %v513
    %536 = vmatprep.subr.mxu0 0.0
    %537 = vmatpush1.msra.mxu0 0.0
    %538 = vmatprep.subr.mxu0 0.0
    %539 = vmatpush1.msra.mxu0 0.0
    %540 = vmatprep.subr.mxu0 0.0
    %541 = vmatpush1.msra.mxu0 0.0
    %542 = vmatprep.subr.mxu0 0.0
    %543 = vmatpush1.msra.mxu0 0.0
    %544 = vmatprep.subr.mxu0 0.0
    %545 = vmatpush1.msra.mxu0 0.0
    %546 = vmatprep.subr.mxu0 0.0
    %547 = vmatpush1.msra.mxu0 0.0
    %548 = vmatprep.subr.mxu0 0.0
    %549 = vmatpush1.msra.mxu0 0.0
    %550 = vmatprep.subr.mxu0 0.0
    %551 = vmatpush1.msra.mxu0 0.0
    %552 = vmatprep.subr.mxu0 0.0
    %553 = vmatpush1.msra.mxu0 0.0
    %554 = vmatprep.subr.mxu0 0.0
    %555 = vmatpush1.msra.mxu0 0.0
    %556 = vmatprep.subr.mxu0 0.0
    %557 = vmatpush1.msra.mxu0 0.0
    %558 = vmatprep.subr.mxu0 0.0
    %559 = vmatpush1.msra.mxu0 0.0
    %560 = vmatprep.subr.mxu0 0.0
    %561 = vmatpush1.msra.mxu0 0.0
    %562 = vmatprep.subr.mxu0 0.0
    %563 = vmatpush1.msra.mxu0 0.0
    %564 = vmatprep.subr.mxu0 0.0
    %565 = vmatpush1.msra.mxu0 0.0
    %566 = vmatprep.subr.mxu0 0.0
    %567 = vmatpush1.msra.mxu0 0.0
    %568 = vmatprep.subr.mxu0 0.0
    %569 = vmatpush1.msra.mxu0 0.0
    %570 = vmatprep.subr.mxu0 0.0
    %571 = vmatpush1.msra.mxu0 0.0
    %572 = vmatprep.subr.mxu0 0.0
    %573 = vmatpush1.msra.mxu0 0.0
    %574 = vmatprep.subr.mxu0 0.0
    %575 = vmatpush1.msra.mxu0 0.0
    %576 = vmatprep.subr.mxu0 0.0
    %577 = vmatpush1.msra.mxu0 0.0
    %578 = vmatprep.subr.mxu0 0.0
    %579 = vmatpush1.msra.mxu0 0.0
    %580 = vmatprep.subr.mxu0 0.0
    %581 = vmatpush1.msra.mxu0 0.0
    %582 = vmatprep.subr.mxu0 0.0
    %583 = vmatpush1.msra.mxu0 0.0
    %584 = vmatprep.subr.mxu0 0.0
    %585 = vmatpush1.msra.mxu0 0.0
    %586 = vmatprep.subr.mxu0 0.0
    %587 = vmatpush1.msra.mxu0 0.0
    %588 = vmatprep.subr.mxu0 0.0
    %589 = vmatpush1.msra.mxu0 0.0
    %590 = vmatprep.subr.mxu0 0.0
    %591 = vmatpush1.msra.mxu0 0.0
    %592 = vmatprep.mubr.f32.mxu0 0.0
    %593 = vmatmul.mubr.f32.gmra.mrb[0].mxu0 %v526
    %v594 = vpop.f32.mrb[0].mxu0
    %v595 = vadd.f32 %v524, %v594
    %v596 = vpop.f32.mrb[0].mxu0
    %597 = vdwg.mxu0
    %598 = vst [vmem:[#allocation3] sm:$0x1] %v595
    // Predicated region
    $region30: #{tpu_custom_call.1} parent=1 // pred_check
      _
    $region31: #{tpu_custom_call.1} parent=1 // pred_check_branch
      %600 = sbr.rel (0) target = $region33
    $region32: #{tpu_custom_call.1} parent=1 // pred_region
      %s602 = ssub.s32 16, 16
      %603 = vsyncadd [#allocation4], %s602
      %s605 = sshll.u32 [#allocation3], 4
      %s606 = int_to_ptr.vmem [resolvable:$true] %s605
      %608 = dma.vmem_to_hbm [thread:$0]  %s606, 16, %s7, [#allocation4]
    $region33: #{tpu_custom_call.1} parent=1 // pred_fallthru
      _
    // Predicated region
    $region34: #{tpu_custom_call.1} parent=1 // pred_check
      _
    $region35: #{tpu_custom_call.1} parent=1 // pred_check_branch
      %610 = sbr.rel (0) target = $region37
    $region36: #{tpu_custom_call.1} parent=1 // pred_region
      %611 = dma.done [#allocation4], 16
    $region37: #{tpu_custom_call.1} parent=1 // pred_fallthru
      _
    %612 = vsyncpa [#allocation4], 1

</llo_original>
